<compile_context>
chip_gen: v7x
topology: tpu7x:2x2x1
jax: 0.10.0
libtpu: 0.0.40
codegen_flags: <defaults>
</compile_context>

<pallas_src>
import jax
import jax.numpy as jnp
from jax.experimental import pallas as pl
from jax.experimental.pallas import tpu as pltpu

LANE = 128
SUBLANE = 8


def _round_up(x, m):
    return (x + m - 1) // m * m


# ----------------------------------------------------------------------------
# Static packing layout for the fused actor+critic parameters.
# ----------------------------------------------------------------------------
def build_layout(input_shape, hidden_layers_sizes, a_output_shape, c_output_shape):
    """Hidden layer l: fused W = [aw_l | cw_l] (l==0) or block-diag, fused bias row.
    Head: block-diag fused W with actor logits in lanes [0, a_out) and critic
    value in lanes [a_out, a_out + c_out). All blocks are zero-padded to a common
    128-multiple lane width `slab_w`; weight blocks are stacked row-wise."""
    n_hidden = len(hidden_layers_sizes)
    fused_widths = [2 * h for h in hidden_layers_sizes] + [a_output_shape + c_output_shape]
    slab_w = _round_up(max(fused_widths), LANE)
    in_pad = _round_up(input_shape, LANE)

    w_rows = []
    row = 0
    for li in range(n_hidden + 1):
        rows = in_pad if li == 0 else slab_w
        w_rows.append((row, rows))
        row += rows
    total_w_rows = _round_up(row, SUBLANE)
    bias_rows = _round_up(n_hidden + 1, SUBLANE)

    return dict(
        input_shape=input_shape, in_pad=in_pad,
        hidden=tuple(hidden_layers_sizes),
        a_out=a_output_shape, c_out=c_output_shape,
        slab_w=slab_w,
        w_rows=tuple(w_rows), total_w_rows=total_w_rows,
        bias_rows=bias_rows,
    )


def pack_params(params, layout):
    """Pack the PyTorch-style (in, out) weights + (out,) biases into one bf16
    weight slab and one small f32 bias slab. Done once; the kernel only sees
    the packed slabs."""
    n_hidden = len(layout["hidden"])
    slab_w = layout["slab_w"]
    w_slab = jnp.zeros((layout["total_w_rows"], slab_w), jnp.float32)
    b_slab = jnp.zeros((layout["bias_rows"], slab_w), jnp.float32)

    for li in range(n_hidden + 1):
        start, _ = layout["w_rows"][li]
        aw = params[f"aw{li}"].astype(jnp.float32)
        cw = params[f"cw{li}"].astype(jnp.float32)
        ab = params[f"ab{li}"].astype(jnp.float32).reshape(-1)
        cb = params[f"cb{li}"].astype(jnp.float32).reshape(-1)
        a_cols = aw.shape[1]
        if li == 0:
            # layer 0: actor & critic share the same input -> simple hstack.
            w_slab = w_slab.at[start:start + aw.shape[0], 0:a_cols].set(aw)
            w_slab = w_slab.at[start:start + cw.shape[0],
                               a_cols:a_cols + cw.shape[1]].set(cw)
        else:
            # deeper layers / head: block-diagonal (actor block, then critic block).
            h_prev = layout["hidden"][li - 1]
            w_slab = w_slab.at[start:start + aw.shape[0], 0:a_cols].set(aw)
            w_slab = w_slab.at[start + h_prev:start + h_prev + cw.shape[0],
                               a_cols:a_cols + cw.shape[1]].set(cw)
        b_slab = b_slab.at[li, 0:a_cols].set(ab)
        b_slab = b_slab.at[li, a_cols:a_cols + cb.shape[0]].set(cb)

    return w_slab.astype(jnp.bfloat16), b_slab


# ----------------------------------------------------------------------------
# Kernel
# ----------------------------------------------------------------------------
def _make_kernel(layout, batch_pad):
    n_hidden = len(layout["hidden"])
    hidden = layout["hidden"]
    a_out = layout["a_out"]
    slab_w = layout["slab_w"]
    w_rows = layout["w_rows"]

    def kernel(x_ref, w_ref, b_ref, out_ref):
        # Observation -> bf16 MXU operand (accumulation stays f32).
        act = x_ref[...].astype(jnp.bfloat16)

        # Lane mask: lanes [0, h) are the actor half (tanh), [h, 2h) the critic
        # half (relu); padded lanes stay exactly zero (relu(0) = 0).
        lane = jax.lax.broadcasted_iota(jnp.int32, (batch_pad, slab_w), 1)

        # Fused hidden layers: ONE matmul per layer feeds both branches.
        for li in range(n_hidden):
            start, rows = w_rows[li]
            w = w_ref[start:start + rows, :]            # bf16 weights (pre-cast)
            b = b_ref[li:li + 1, :]                     # f32 fused bias row
            h = jnp.dot(act, w, preferred_element_type=jnp.float32) + b
            h_sz = hidden[li]
            act = jnp.where(lane < h_sz, jnp.tanh(h),
                            jnp.maximum(h, 0.0)).astype(jnp.bfloat16)

        # Fused head: actor logits in lanes [0, a_out), critic value in
        # lanes [a_out, a_out + c_out), zeros elsewhere.
        start, rows = w_rows[n_hidden]
        w = w_ref[start:start + rows, :]
        b = b_ref[n_hidden:n_hidden + 1, :]
        out = jnp.dot(act, w, preferred_element_type=jnp.float32) + b

        # Masked full-width softmax over the actor lanes (keeps everything at
        # 128-lane width -> single unmasked lane-dense store).
        is_actor = lane < a_out
        masked = jnp.where(is_actor, out, -jnp.inf)
        m = jnp.max(masked, axis=-1, keepdims=True)
        e = jnp.exp(masked - m)
        inv = pl.reciprocal(jnp.sum(e, axis=-1, keepdims=True), approx=True)
        out_ref[...] = jnp.where(is_actor, e * inv, out)

    return kernel


def make_dnn_ac_forward(layout, batch):
    """Builds a jitted forward(observation, w_slab, b_slab) -> (v, probs)."""
    batch_pad = _round_up(max(batch, SUBLANE), SUBLANE)
    in_pad = layout["in_pad"]
    a_out = layout["a_out"]
    c_out = layout["c_out"]
    slab_w = layout["slab_w"]

    vmem = pl.BlockSpec(memory_space=pltpu.MemorySpace.VMEM)
    call = pl.pallas_call(
        _make_kernel(layout, batch_pad),
        out_shape=jax.ShapeDtypeStruct((batch_pad, slab_w), jnp.float32),
        in_specs=[vmem, vmem, vmem],   # 3 DMAs: observation + bf16 weights + f32 biases
        out_specs=vmem,                # 1 lane-dense output DMA
    )

    @jax.jit
    def forward(observation, w_slab, b_slab):
        obs = observation.astype(jnp.float32)
        obs = jnp.pad(obs, ((0, batch_pad - obs.shape[0]),
                            (0, in_pad - obs.shape[1])))
        res = call(obs, w_slab, b_slab)
        probs = res[:batch, :a_out]
        # PyTorch: `self.c_layers[-1](v)[0]` -> first batch row of critic head.
        v = res[0, a_out:a_out + c_out]
        return v, probs

    return forward


# ----------------------------------------------------------------------------
# Synthetic parameters (Linear stored as (in, out) weight + (1, out) bias)
# ----------------------------------------------------------------------------
def init_params(key, input_shape, a_output_shape, c_output_shape, hidden):
    sizes_a = [input_shape] + hidden + [a_output_shape]
    sizes_c = [input_shape] + hidden + [c_output_shape]
    params = {}
    keys = jax.random.split(key, 2 * (len(hidden) + 1))
    ki = 0
    for i in range(len(hidden) + 1):
        bound = 1.0 / jnp.sqrt(sizes_a[i])
        params[f"aw{i}"] = jax.random.uniform(
            keys[ki], (sizes_a[i], sizes_a[i + 1]), jnp.float32, -bound, bound)
        params[f"ab{i}"] = jnp.zeros((1, sizes_a[i + 1]), jnp.float32) + 0.01 * i
        ki += 1
        bound_c = 1.0 / jnp.sqrt(sizes_c[i])
        params[f"cw{i}"] = jax.random.uniform(
            keys[ki], (sizes_c[i], sizes_c[i + 1]), jnp.float32, -bound_c, bound_c)
        params[f"cb{i}"] = jnp.zeros((1, sizes_c[i + 1]), jnp.float32) + 0.02 * i
        ki += 1
    return params


if __name__ == "__main__":
    B = 8
    INPUT_SHAPE = 16
    A_OUT = 4
    C_OUT = 1
    HIDDEN = [16, 16]

    key = jax.random.PRNGKey(0)
    k_obs, k_params = jax.random.split(key)

    obs = jax.random.normal(k_obs, (B, INPUT_SHAPE), dtype=jnp.float32)
    params = init_params(k_params, INPUT_SHAPE, A_OUT, C_OUT, HIDDEN)

    layout = build_layout(INPUT_SHAPE, HIDDEN, A_OUT, C_OUT)
    w_slab, b_slab = pack_params(params, layout)     # pack once, reuse across calls
    forward = make_dnn_ac_forward(layout, B)

    v, probs = forward(obs, w_slab, b_slab)
    jax.block_until_ready((v, probs))

    # Sanity check against a pure-f32 JAX reference. The kernel uses bf16 MXU
    # operands, so tolerances cover bf16 rounding.
    def ref_forward(x, p):
        a = jnp.tanh(x @ p["aw0"] + p["ab0"])
        a = jnp.tanh(a @ p["aw1"] + p["ab1"])
        pr = jax.nn.softmax(a @ p["aw2"] + p["ab2"], axis=-1)
        c = jax.nn.relu(x @ p["cw0"] + p["cb0"])
        c = jax.nn.relu(c @ p["cw1"] + p["cb1"])
        vv = (c @ p["cw2"] + p["cb2"])[0]
        return vv, pr

    v_ref, probs_ref = ref_forward(obs, params)
    assert v.shape == (C_OUT,)
    assert probs.shape == (B, A_OUT)
    assert jnp.allclose(v, v_ref, atol=5e-2, rtol=5e-2)
    assert jnp.allclose(probs, probs_ref, atol=5e-2, rtol=5e-2)
    assert jnp.allclose(jnp.sum(probs, axis=-1), 1.0, atol=1e-2)

    print("KERNEL_OK")
</pallas_src>

<mosaic_0001>
module attributes {stable_mosaic.version = 11 : i64} {
  func.func @kernel(%arg0: memref<8x128xf32, #tpu.memory_space<vmem>>, %arg1: memref<384x128xbf16, #tpu.memory_space<vmem>>, %arg2: memref<8x128xf32, #tpu.memory_space<vmem>>, %arg3: memref<8x128xf32, #tpu.memory_space<vmem>>) attributes {dimension_semantics = [], scalar_prefetch = 0 : i64, scratch_operands = 0 : i64, tpu.core_type = #tpu.core_type<tc>} {
    %c0 = arith.constant 0 : index
    %c0_0 = arith.constant 0 : index
    %0 = vector.load %arg0[%c0, %c0_0] : memref<8x128xf32, #tpu.memory_space<vmem>>, vector<8x128xf32>
    %1 = arith.truncf %0 : vector<8x128xf32> to vector<8x128xbf16>
    %2 = tpu.iota {dimensions = array<i32: 1>} : vector<8x128xi32>
    %c0_1 = arith.constant 0 : index
    %c0_2 = arith.constant 0 : index
    %3 = vector.load %arg1[%c0_1, %c0_2] : memref<384x128xbf16, #tpu.memory_space<vmem>>, vector<128x128xbf16>
    %c0_3 = arith.constant 0 : index
    %c0_4 = arith.constant 0 : index
    %4 = vector.load %arg2[%c0_3, %c0_4] : memref<8x128xf32, #tpu.memory_space<vmem>>, vector<1x128xf32>
    %cst = arith.constant dense<0.000000e+00> : vector<8x128xf32>
    %5 = tpu.matmul %1, %3, %cst {dimension_numbers = #tpu.dot_dimension_numbers<[1], [0], [0], [1], [0, 0, 1, 1], [], []>} : vector<8x128xbf16>, vector<128x128xbf16>, vector<8x128xf32> -> vector<8x128xf32>
    %6 = vector.broadcast %4 : vector<1x128xf32> to vector<8x128xf32>
    %7 = arith.addf %5, %6 : vector<8x128xf32>
    %c16_i32 = arith.constant 16 : i32
    %8 = vector.broadcast %c16_i32 : i32 to vector<8x128xi32>
    %9 = arith.cmpi slt, %2, %8 : vector<8x128xi32>
    %10 = math.tanh %7 : vector<8x128xf32>
    %cst_5 = arith.constant 0.000000e+00 : f32
    %11 = vector.broadcast %cst_5 : f32 to vector<8x128xf32>
    %12 = arith.maximumf %7, %11 : vector<8x128xf32>
    %13 = arith.select %9, %10, %12 : vector<8x128xi1>, vector<8x128xf32>
    %14 = arith.truncf %13 : vector<8x128xf32> to vector<8x128xbf16>
    %c128 = arith.constant 128 : index
    %c0_6 = arith.constant 0 : index
    %15 = vector.load %arg1[%c128, %c0_6] : memref<384x128xbf16, #tpu.memory_space<vmem>>, vector<128x128xbf16>
    %c1 = arith.constant 1 : index
    %c0_7 = arith.constant 0 : index
    %16 = vector.load %arg2[%c1, %c0_7] : memref<8x128xf32, #tpu.memory_space<vmem>>, vector<1x128xf32>
    %cst_8 = arith.constant dense<0.000000e+00> : vector<8x128xf32>
    %17 = tpu.matmul %14, %15, %cst_8 {dimension_numbers = #tpu.dot_dimension_numbers<[1], [0], [0], [1], [0, 0, 1, 1], [], []>} : vector<8x128xbf16>, vector<128x128xbf16>, vector<8x128xf32> -> vector<8x128xf32>
    %18 = vector.broadcast %16 : vector<1x128xf32> to vector<8x128xf32>
    %19 = arith.addf %17, %18 : vector<8x128xf32>
    %c16_i32_9 = arith.constant 16 : i32
    %20 = vector.broadcast %c16_i32_9 : i32 to vector<8x128xi32>
    %21 = arith.cmpi slt, %2, %20 : vector<8x128xi32>
    %22 = math.tanh %19 : vector<8x128xf32>
    %cst_10 = arith.constant 0.000000e+00 : f32
    %23 = vector.broadcast %cst_10 : f32 to vector<8x128xf32>
    %24 = arith.maximumf %19, %23 : vector<8x128xf32>
    %25 = arith.select %21, %22, %24 : vector<8x128xi1>, vector<8x128xf32>
    %26 = arith.truncf %25 : vector<8x128xf32> to vector<8x128xbf16>
    %c256 = arith.constant 256 : index
    %c0_11 = arith.constant 0 : index
    %27 = vector.load %arg1[%c256, %c0_11] : memref<384x128xbf16, #tpu.memory_space<vmem>>, vector<128x128xbf16>
    %c2 = arith.constant 2 : index
    %c0_12 = arith.constant 0 : index
    %28 = vector.load %arg2[%c2, %c0_12] : memref<8x128xf32, #tpu.memory_space<vmem>>, vector<1x128xf32>
    %cst_13 = arith.constant dense<0.000000e+00> : vector<8x128xf32>
    %29 = tpu.matmul %26, %27, %cst_13 {dimension_numbers = #tpu.dot_dimension_numbers<[1], [0], [0], [1], [0, 0, 1, 1], [], []>} : vector<8x128xbf16>, vector<128x128xbf16>, vector<8x128xf32> -> vector<8x128xf32>
    %30 = vector.broadcast %28 : vector<1x128xf32> to vector<8x128xf32>
    %31 = arith.addf %29, %30 : vector<8x128xf32>
    %c4_i32 = arith.constant 4 : i32
    %32 = vector.broadcast %c4_i32 : i32 to vector<8x128xi32>
    %33 = arith.cmpi slt, %2, %32 : vector<8x128xi32>
    %cst_14 = arith.constant 0xFF800000 : f32
    %34 = vector.broadcast %cst_14 : f32 to vector<8x128xf32>
    %35 = arith.select %33, %31, %34 : vector<8x128xi1>, vector<8x128xf32>
    %cst_15 = arith.constant dense<0xFF800000> : vector<8xf32>
    %36 = vector.multi_reduction <maximumf>, %35, %cst_15 [1] : vector<8x128xf32> to vector<8xf32>
    %37 = vector.shape_cast %36 : vector<8xf32> to vector<8x1xf32>
    %38 = vector.broadcast %37 : vector<8x1xf32> to vector<8x128xf32>
    %39 = arith.subf %35, %38 : vector<8x128xf32>
    %40 = math.exp %39 : vector<8x128xf32>
    %cst_16 = arith.constant dense<0.000000e+00> : vector<8xf32>
    %41 = vector.multi_reduction <add>, %40, %cst_16 [1] : vector<8x128xf32> to vector<8xf32>
    %42 = vector.shape_cast %41 : vector<8xf32> to vector<8x1xf32>
    %43 = tpu.reciprocal %42 {approx = true} : vector<8x1xf32> -> vector<8x1xf32>
    %44 = vector.broadcast %43 : vector<8x1xf32> to vector<8x128xf32>
    %45 = arith.mulf %40, %44 : vector<8x128xf32>
    %46 = arith.select %33, %45, %31 : vector<8x128xi1>, vector<8x128xf32>
    %c0_17 = arith.constant 0 : index
    %c0_18 = arith.constant 0 : index
    %47 = vector.load %arg3[%c0_17, %c0_18] : memref<8x128xf32, #tpu.memory_space<vmem>>, vector<8x128xf32>
    tpu.vector_store %arg3[%c0_17, %c0_18], %46 {strides = array<i32>} : memref<8x128xf32, #tpu.memory_space<vmem>>, vector<8x128xf32>,
    return
  }
}

</mosaic_0001>

<llo_original>
// kernel: forward.1
$region0: #{forward.1}
  #allocation0 [shape = 'u32[]', space=smem, size = 0x4, offset = 0x4, fixed_abs, tag = 'smem constant byte address 0x4 - core index']
  #allocation1 [shape = 'u32[144,128]{1,0:T(1,128)}', space=vmem, size = 0x12000, scoped, tag = 'internal scratch']
  %s0 = inlined_call_operand.vmem [shape: f32[8,128], index: 0, kind: input, shape index: {}]
  %s1 = inlined_call_operand.hbm [shape: bf16[384,128], index: 1, kind: input, shape index: {}]
  %s2 = inlined_call_operand.vmem [shape: f32[8,128], index: 2, kind: input, shape index: {}]
  %s3 = inlined_call_operand.vmem [shape: f32[8,128], index: 3, kind: output, shape index: {}]
  %s4 = sld [smem:[#allocation0]]
  $region26: #{forward.1} parent=0
    _
  %s6 = ssub.s32 1, %s4
  %s7 = scalar_select 0, %s6, %s4
  $region1: #{forward.1} parent=0
    #allocation2 [shape = 'u8[98304]{0}', space=vmem, size = 0x18000, scoped, tag = 'input window, operand 1, single buffered']
    #allocation3 [shape = 's32[1]{0}', space=sflag, size = 0x4, scoped, tag = 'scoped memory for forward.1']
    %8 = vsyncpa [#allocation3], 0
    // Predicated region
    $region2: #{forward.1} parent=1 // pred_check
      _
    $region3: #{forward.1} parent=1 // pred_check_branch
      %10 = sbr.rel (0) target = $region5
    $region4: #{forward.1} parent=1 // pred_region
      _
    $region5: #{forward.1} parent=1 // pred_fallthru
      _
    // Predicated region
    $region6: #{forward.1} parent=1 // pred_check
      _
    $region7: #{forward.1} parent=1 // pred_check_branch
      %12 = sbr.rel (0) target = $region9
    $region8: #{forward.1} parent=1 // pred_region
      %s14 = ssub.s32 3072, 3072
      %15 = vsyncadd [#allocation3], %s14
      %s16 = sshll.u32 [#allocation2], 4
      %s17 = int_to_ptr.vmem [resolvable:$true] %s16
      %22 = dma.hbm_to_vmem [thread:$0]  %s1, 3072, %s17, [#allocation3], 64, 64, 4
    $region9: #{forward.1} parent=1 // pred_fallthru
      _
    // Predicated region
    $region10: #{forward.1} parent=1 // pred_check
      _
    $region11: #{forward.1} parent=1 // pred_check_branch
      %24 = sbr.rel (0) target = $region13
    $region12: #{forward.1} parent=1 // pred_region
      _
    $region13: #{forward.1} parent=1 // pred_fallthru
      _
    // Predicated region
    $region14: #{forward.1} parent=1 // pred_check
      _
    $region15: #{forward.1} parent=1 // pred_check_branch
      %26 = sbr.rel (0) target = $region17
    $region16: #{forward.1} parent=1 // pred_region
      %27 = dma.done [#allocation3], 3072
    $region17: #{forward.1} parent=1 // pred_fallthru
      _
    %v29 = vld [vmem:[%s0] sm:$0xff]
    %v30 = vpack.c.bf16 %v29, %v29
    %v31 = vlaneseq
    %v32 = vand.u32 %v31, 127
    %v33 = vld [vmem:[#allocation2] sm:$0xf]
    %v34 = vld [vmem:[#allocation2 + $0x4] sm:$0xf]
    %v35 = vld [vmem:[#allocation2 + $0x8] sm:$0xf]
    %v36 = vld [vmem:[#allocation2 + $0xc] sm:$0xf]
    %v37 = vld [vmem:[#allocation2 + $0x10] sm:$0xf]
    %v38 = vld [vmem:[#allocation2 + $0x14] sm:$0xf]
    %v39 = vld [vmem:[#allocation2 + $0x18] sm:$0xf]
    %v40 = vld [vmem:[#allocation2 + $0x1c] sm:$0xf]
    %v41 = vld [vmem:[#allocation2 + $0x20] sm:$0xf]
    %v42 = vld [vmem:[#allocation2 + $0x24] sm:$0xf]
    %v43 = vld [vmem:[#allocation2 + $0x28] sm:$0xf]
    %v44 = vld [vmem:[#allocation2 + $0x2c] sm:$0xf]
    %v45 = vld [vmem:[#allocation2 + $0x30] sm:$0xf]
    %v46 = vld [vmem:[#allocation2 + $0x34] sm:$0xf]
    %v47 = vld [vmem:[#allocation2 + $0x38] sm:$0xf]
    %v48 = vld [vmem:[#allocation2 + $0x3c] sm:$0xf]
    %v49 = vld [vmem:[%s2] sm:$0x1]
    %v50 = vlaneseq
    %v51 = vshrl.u32 %v50, 7
    %v52 = vsub.s32 0, %v51
    %v53 = vrot.slane %v49, %v52
    %v70 = vunpack.c.l.b16 %v33
    %v71 = vunpack.c.l.b16 %v34
    %v72 = vunpack.c.l.b16 %v35
    %v73 = vunpack.c.l.b16 %v36
    %v74 = vunpack.c.l.b16 %v37
    %v75 = vunpack.c.l.b16 %v38
    %v76 = vunpack.c.l.b16 %v39
    %v77 = vunpack.c.l.b16 %v40
    %v78 = vunpack.c.l.b16 %v41
    %v79 = vunpack.c.l.b16 %v42
    %v80 = vunpack.c.l.b16 %v43
    %v81 = vunpack.c.l.b16 %v44
    %v82 = vunpack.c.l.b16 %v45
    %v83 = vunpack.c.l.b16 %v46
    %v84 = vunpack.c.l.b16 %v47
    %v85 = vunpack.c.l.b16 %v48
    %v86 = vpack.c.b16 %v71, %v70
    %v87 = vpack.c.b16 %v73, %v72
    %v88 = vpack.c.b16 %v75, %v74
    %v89 = vpack.c.b16 %v77, %v76
    %v90 = vpack.c.b16 %v79, %v78
    %v91 = vpack.c.b16 %v81, %v80
    %v92 = vpack.c.b16 %v83, %v82
    %v93 = vpack.c.b16 %v85, %v84
    %102 = vmatprep.subr.bf16.mxu0 0
    %103 = vmatpush1.bf16.msra.mxu0 %v86
    %104 = vmatprep.subr.bf16.mxu0 0
    %105 = vmatpush1.bf16.msra.mxu0 %v87
    %106 = vmatprep.subr.bf16.mxu0 0
    %107 = vmatpush1.bf16.msra.mxu0 %v88
    %108 = vmatprep.subr.bf16.mxu0 0
    %109 = vmatpush1.bf16.msra.mxu0 %v89
    %110 = vmatprep.subr.bf16.mxu0 0
    %111 = vmatpush1.bf16.msra.mxu0 %v90
    %112 = vmatprep.subr.bf16.mxu0 0
    %113 = vmatpush1.bf16.msra.mxu0 %v91
    %114 = vmatprep.subr.bf16.mxu0 0
    %115 = vmatpush1.bf16.msra.mxu0 %v92
    %116 = vmatprep.subr.bf16.mxu0 0
    %117 = vmatpush1.bf16.msra.mxu0 %v93
    %118 = vmatprep.subr.bf16.mxu0 0
    %119 = vmatpush1.bf16.msra.mxu0 0
    %120 = vmatprep.subr.bf16.mxu0 0
    %121 = vmatpush1.bf16.msra.mxu0 0
    %122 = vmatprep.subr.bf16.mxu0 0
    %123 = vmatpush1.bf16.msra.mxu0 0
    %124 = vmatprep.subr.bf16.mxu0 0
    %125 = vmatpush1.bf16.msra.mxu0 0
    %126 = vmatprep.subr.bf16.mxu0 0
    %127 = vmatpush1.bf16.msra.mxu0 0
    %128 = vmatprep.subr.bf16.mxu0 0
    %129 = vmatpush1.bf16.msra.mxu0 0
    %130 = vmatprep.subr.bf16.mxu0 0
    %131 = vmatpush1.bf16.msra.mxu0 0
    %132 = vmatprep.subr.bf16.mxu0 0
    %133 = vmatpush1.bf16.msra.mxu0 0
    %134 = vmatprep.mubr.bf16.mxu0 0
    %135 = vmatmul.mubr.bf16.gmra.mrb[0].mxu0 %v30
    %v136 = vpop.f32.mrb[0].mxu0
    %v137 = vadd.f32 %v53, %v136
    %v138 = vpop.f32.mrb[0].mxu0
    %v139 = vpop.f32.mrb[0].mxu0
    %v140 = vpop.f32.mrb[0].mxu0
    %141 = vdwg.mxu0
    %vm142 = vcmp.lt.s32.totalorder %v32, 16
    %v143 = vtanh.pop %v137
    %v144 = vmax.f32 %v137, 0.0
    %v145 = vsel %vm142, %v143, %v144
    %v146 = vpack.c.bf16 %v145, %v145
    %v147 = vld [vmem:[#allocation2 + $0x40] sm:$0xf]
    %v148 = vld [vmem:[#allocation2 + $0x44] sm:$0xf]
    %v149 = vld [vmem:[#allocation2 + $0x48] sm:$0xf]
    %v150 = vld [vmem:[#allocation2 + $0x4c] sm:$0xf]
    %v151 = vld [vmem:[#allocation2 + $0x50] sm:$0xf]
    %v152 = vld [vmem:[#allocation2 + $0x54] sm:$0xf]
    %v153 = vld [vmem:[#allocation2 + $0x58] sm:$0xf]
    %v154 = vld [vmem:[#allocation2 + $0x5c] sm:$0xf]
    %v155 = vld [vmem:[#allocation2 + $0x60] sm:$0xf]
    %v156 = vld [vmem:[#allocation2 + $0x64] sm:$0xf]
    %v157 = vld [vmem:[#allocation2 + $0x68] sm:$0xf]
    %v158 = vld [vmem:[#allocation2 + $0x6c] sm:$0xf]
    %v159 = vld [vmem:[#allocation2 + $0x70] sm:$0xf]
    %v160 = vld [vmem:[#allocation2 + $0x74] sm:$0xf]
    %v161 = vld [vmem:[#allocation2 + $0x78] sm:$0xf]
    %v162 = vld [vmem:[#allocation2 + $0x7c] sm:$0xf]
    %v163 = vld [vmem:[%s2 + $0x1] sm:$0x1]
    %v164 = vlaneseq
    %v165 = vshrl.u32 %v164, 7
    %v166 = vsub.s32 0, %v165
    %v167 = vrot.slane %v163, %v166
    %v184 = vunpack.c.l.b16 %v147
    %v185 = vunpack.c.l.b16 %v148
    %v186 = vunpack.c.l.b16 %v149
    %v187 = vunpack.c.l.b16 %v150
    %v188 = vunpack.c.l.b16 %v151
    %v189 = vunpack.c.l.b16 %v152
    %v190 = vunpack.c.l.b16 %v153
    %v191 = vunpack.c.l.b16 %v154
    %v192 = vunpack.c.l.b16 %v155
    %v193 = vunpack.c.l.b16 %v156
    %v194 = vunpack.c.l.b16 %v157
    %v195 = vunpack.c.l.b16 %v158
    %v196 = vunpack.c.l.b16 %v159
    %v197 = vunpack.c.l.b16 %v160
    %v198 = vunpack.c.l.b16 %v161
    %v199 = vunpack.c.l.b16 %v162
    %v200 = vpack.c.b16 %v185, %v184
    %v201 = vpack.c.b16 %v187, %v186
    %v202 = vpack.c.b16 %v189, %v188
    %v203 = vpack.c.b16 %v191, %v190
    %v204 = vpack.c.b16 %v193, %v192
    %v205 = vpack.c.b16 %v195, %v194
    %v206 = vpack.c.b16 %v197, %v196
    %v207 = vpack.c.b16 %v199, %v198
    %216 = vmatprep.subr.bf16.mxu0 0
    %217 = vmatpush1.bf16.msra.mxu0 %v200
    %218 = vmatprep.subr.bf16.mxu0 0
    %219 = vmatpush1.bf16.msra.mxu0 %v201
    %220 = vmatprep.subr.bf16.mxu0 0
    %221 = vmatpush1.bf16.msra.mxu0 %v202
    %222 = vmatprep.subr.bf16.mxu0 0
    %223 = vmatpush1.bf16.msra.mxu0 %v203
    %224 = vmatprep.subr.bf16.mxu0 0
    %225 = vmatpush1.bf16.msra.mxu0 %v204
    %226 = vmatprep.subr.bf16.mxu0 0
    %227 = vmatpush1.bf16.msra.mxu0 %v205
    %228 = vmatprep.subr.bf16.mxu0 0
    %229 = vmatpush1.bf16.msra.mxu0 %v206
    %230 = vmatprep.subr.bf16.mxu0 0
    %231 = vmatpush1.bf16.msra.mxu0 %v207
    %232 = vmatprep.subr.bf16.mxu0 0
    %233 = vmatpush1.bf16.msra.mxu0 0
    %234 = vmatprep.subr.bf16.mxu0 0
    %235 = vmatpush1.bf16.msra.mxu0 0
    %236 = vmatprep.subr.bf16.mxu0 0
    %237 = vmatpush1.bf16.msra.mxu0 0
    %238 = vmatprep.subr.bf16.mxu0 0
    %239 = vmatpush1.bf16.msra.mxu0 0
    %240 = vmatprep.subr.bf16.mxu0 0
    %241 = vmatpush1.bf16.msra.mxu0 0
    %242 = vmatprep.subr.bf16.mxu0 0
    %243 = vmatpush1.bf16.msra.mxu0 0
    %244 = vmatprep.subr.bf16.mxu0 0
    %245 = vmatpush1.bf16.msra.mxu0 0
    %246 = vmatprep.subr.bf16.mxu0 0
    %247 = vmatpush1.bf16.msra.mxu0 0
    %248 = vmatprep.mubr.bf16.mxu0 0
    %249 = vmatmul.mubr.bf16.gmra.mrb[0].mxu0 %v146
    %v250 = vpop.f32.mrb[0].mxu0
    %v251 = vadd.f32 %v167, %v250
    %v252 = vpop.f32.mrb[0].mxu0
    %v253 = vpop.f32.mrb[0].mxu0
    %v254 = vpop.f32.mrb[0].mxu0
    %255 = vdwg.mxu0
    %v256 = vtanh.pop %v251
    %v257 = vmax.f32 %v251, 0.0
    %v258 = vsel %vm142, %v256, %v257
    %v259 = vpack.c.bf16 %v258, %v258
    %v260 = vld [vmem:[#allocation2 + $0x80] sm:$0xf]
    %v261 = vld [vmem:[#allocation2 + $0x84] sm:$0xf]
    %v262 = vld [vmem:[#allocation2 + $0x88] sm:$0xf]
    %v263 = vld [vmem:[#allocation2 + $0x8c] sm:$0xf]
    %v264 = vld [vmem:[#allocation2 + $0x90] sm:$0xf]
    %v265 = vld [vmem:[#allocation2 + $0x94] sm:$0xf]
    %v266 = vld [vmem:[#allocation2 + $0x98] sm:$0xf]
    %v267 = vld [vmem:[#allocation2 + $0x9c] sm:$0xf]
    %v268 = vld [vmem:[#allocation2 + $0xa0] sm:$0xf]
    %v269 = vld [vmem:[#allocation2 + $0xa4] sm:$0xf]
    %v270 = vld [vmem:[#allocation2 + $0xa8] sm:$0xf]
    %v271 = vld [vmem:[#allocation2 + $0xac] sm:$0xf]
    %v272 = vld [vmem:[#allocation2 + $0xb0] sm:$0xf]
    %v273 = vld [vmem:[#allocation2 + $0xb4] sm:$0xf]
    %v274 = vld [vmem:[#allocation2 + $0xb8] sm:$0xf]
    %v275 = vld [vmem:[#allocation2 + $0xbc] sm:$0xf]
    %v276 = vld [vmem:[%s2 + $0x2] sm:$0x1]
    %v277 = vlaneseq
    %v278 = vshrl.u32 %v277, 7
    %v279 = vsub.s32 0, %v278
    %v280 = vrot.slane %v276, %v279
    %v297 = vunpack.c.l.b16 %v260
    %v298 = vunpack.c.l.b16 %v261
    %v299 = vunpack.c.l.b16 %v262
    %v300 = vunpack.c.l.b16 %v263
    %v301 = vunpack.c.l.b16 %v264
    %v302 = vunpack.c.l.b16 %v265
    %v303 = vunpack.c.l.b16 %v266
    %v304 = vunpack.c.l.b16 %v267
    %v305 = vunpack.c.l.b16 %v268
    %v306 = vunpack.c.l.b16 %v269
    %v307 = vunpack.c.l.b16 %v270
    %v308 = vunpack.c.l.b16 %v271
    %v309 = vunpack.c.l.b16 %v272
    %v310 = vunpack.c.l.b16 %v273
    %v311 = vunpack.c.l.b16 %v274
    %v312 = vunpack.c.l.b16 %v275
    %v313 = vpack.c.b16 %v298, %v297
    %v314 = vpack.c.b16 %v300, %v299
    %v315 = vpack.c.b16 %v302, %v301
    %v316 = vpack.c.b16 %v304, %v303
    %v317 = vpack.c.b16 %v306, %v305
    %v318 = vpack.c.b16 %v308, %v307
    %v319 = vpack.c.b16 %v310, %v309
    %v320 = vpack.c.b16 %v312, %v311
    %329 = vmatprep.subr.bf16.mxu0 0
    %330 = vmatpush1.bf16.msra.mxu0 %v313
    %331 = vmatprep.subr.bf16.mxu0 0
    %332 = vmatpush1.bf16.msra.mxu0 %v314
    %333 = vmatprep.subr.bf16.mxu0 0
    %334 = vmatpush1.bf16.msra.mxu0 %v315
    %335 = vmatprep.subr.bf16.mxu0 0
    %336 = vmatpush1.bf16.msra.mxu0 %v316
    %337 = vmatprep.subr.bf16.mxu0 0
    %338 = vmatpush1.bf16.msra.mxu0 %v317
    %339 = vmatprep.subr.bf16.mxu0 0
    %340 = vmatpush1.bf16.msra.mxu0 %v318
    %341 = vmatprep.subr.bf16.mxu0 0
    %342 = vmatpush1.bf16.msra.mxu0 %v319
    %343 = vmatprep.subr.bf16.mxu0 0
    %344 = vmatpush1.bf16.msra.mxu0 %v320
    %345 = vmatprep.subr.bf16.mxu0 0
    %346 = vmatpush1.bf16.msra.mxu0 0
    %347 = vmatprep.subr.bf16.mxu0 0
    %348 = vmatpush1.bf16.msra.mxu0 0
    %349 = vmatprep.subr.bf16.mxu0 0
    %350 = vmatpush1.bf16.msra.mxu0 0
    %351 = vmatprep.subr.bf16.mxu0 0
    %352 = vmatpush1.bf16.msra.mxu0 0
    %353 = vmatprep.subr.bf16.mxu0 0
    %354 = vmatpush1.bf16.msra.mxu0 0
    %355 = vmatprep.subr.bf16.mxu0 0
    %356 = vmatpush1.bf16.msra.mxu0 0
    %357 = vmatprep.subr.bf16.mxu0 0
    %358 = vmatpush1.bf16.msra.mxu0 0
    %359 = vmatprep.subr.bf16.mxu0 0
    %360 = vmatpush1.bf16.msra.mxu0 0
    %361 = vmatprep.mubr.bf16.mxu0 0
    %362 = vmatmul.mubr.bf16.gmra.mrb[0].mxu0 %v259
    %v363 = vpop.f32.mrb[0].mxu0
    %v364 = vadd.f32 %v280, %v363
    %v365 = vpop.f32.mrb[0].mxu0
    %v366 = vpop.f32.mrb[0].mxu0
    %v367 = vpop.f32.mrb[0].mxu0
    %368 = vdwg.mxu0
    %vm369 = vcmp.lt.s32.totalorder %v32, 4
    %v370 = vsel %vm369, %v364, -inf
    %371 = vmax.xlane.f32.xlu0 %v370
    %v372 = vpop.xlane.xlu0 %371
    %v373 = vsub.f32 %v370, %v372
    %v374 = vmul.f32 %v373, 1.442695
    %v375 = vpow.pop %v374
    %376 = vadd.xlane.f32.xlu0 %v375
    %v377 = vpop.xlane.xlu0 %376
    %v378 = vrcp.pop %v377
    %v379 = vmul.f32 %v375, %v378
    %v380 = vsel %vm369, %v379, %v364
    %381 = vst [vmem:[%s3] sm:$0xff] %v380
    // Predicated region
    $region18: #{forward.1} parent=1 // pred_check
      _
    $region19: #{forward.1} parent=1 // pred_check_branch
      %383 = sbr.rel (0) target = $region21
    $region20: #{forward.1} parent=1 // pred_region
      _
    $region21: #{forward.1} parent=1 // pred_fallthru
      _
    // Predicated region
    $region22: #{forward.1} parent=1 // pred_check
      _
    $region23: #{forward.1} parent=1 // pred_check_branch
      %385 = sbr.rel (0) target = $region25
    $region24: #{forward.1} parent=1 // pred_region
      _
    $region25: #{forward.1} parent=1 // pred_fallthru
      _
    %386 = vsyncpa [#allocation3], 1

</llo_original>
